<compile_context>
chip_gen: v6e
topology: v6e:2x2x1
jax: 0.10.0
libtpu: 0.0.40
codegen_flags: <defaults>
</compile_context>

<pallas_src>
import functools

import jax
import jax.numpy as jnp
from jax import lax
from jax.experimental import pallas as pl
from jax.experimental.pallas import tpu as pltpu


# --------------------------------------------------------------------------
# helpers
# --------------------------------------------------------------------------
def _round_up(x: int, m: int) -> int:
    return ((x + m - 1) // m) * m


def _pad2d(a, rows: int, cols: int):
    r, c = a.shape
    if r == rows and c == cols:
        return a
    return jnp.pad(a, ((0, rows - r), (0, cols - c)))


# --------------------------------------------------------------------------
# Path 1: input_dim == 1  ->  pure VPU broadcast multiply-add (no MXU).
# --------------------------------------------------------------------------
def _forcefc_k1_kernel(x_ref, w_ref, b_ref, o_ref):
    # x_ref: (tb, 1), w_ref: (1, Np), b_ref: (1, Np) -> o_ref: (tb, Np)
    # Rank-1 outer product + bias, all on the VPU (lane-dense, Np % 128 == 0).
    o_ref[...] = x_ref[...] * w_ref[...] + b_ref[...]


def _force_fc_k1(x, weight, bias):
    B, _ = x.shape
    N = weight.shape[0]

    Np = _round_up(max(N, 128), 128)
    # Batch tile: sublane aligned; cap so the (tb, Np) output tile stays small
    # in VMEM even for large batches (double-buffered by the pipeline).
    tb = min(512, _round_up(max(B, 8), 8))
    Bp = _round_up(max(B, tb), tb)

    x_p = _pad2d(x, Bp, 1)
    # K == 1: the "transpose" is a free reshape (N, 1) -> (1, N), then lane-pad.
    w_row = _pad2d(jnp.reshape(weight, (1, N)), 1, Np)
    b_row = _pad2d(jnp.reshape(bias, (1, N)), 1, Np)

    grid = (Bp // tb,)

    cost = pl.CostEstimate(
        flops=2 * Bp * Np,
        transcendentals=0,
        bytes_accessed=4 * (Bp * 1 + Np + Np + Bp * Np),
    )

    out_p = pl.pallas_call(
        _forcefc_k1_kernel,
        out_shape=jax.ShapeDtypeStruct((Bp, Np), x.dtype),
        grid_spec=pltpu.PrefetchScalarGridSpec(
            num_scalar_prefetch=0,
            grid=grid,
            in_specs=[
                pl.BlockSpec((tb, 1), lambda i: (i, 0)),
                pl.BlockSpec((1, Np), lambda i: (0, 0)),
                pl.BlockSpec((1, Np), lambda i: (0, 0)),
            ],
            out_specs=pl.BlockSpec((tb, Np), lambda i: (i, 0)),
        ),
        compiler_params=pltpu.CompilerParams(
            dimension_semantics=("parallel",),
        ),
        cost_estimate=cost,
    )(x_p, w_row, b_row)

    return out_p[:B, :N]


# --------------------------------------------------------------------------
# Path 2: general (M, K) x (N, K)^T + b  ->  tiled MXU matmul.
# --------------------------------------------------------------------------
def _forcefc_tiled_kernel(x_ref, w_ref, b_ref, o_ref, acc_ref):
    k = pl.program_id(2)

    @pl.when(k == 0)
    def _init():
        acc_ref[...] = jnp.zeros_like(acc_ref)

    # x_ref: (tm, tk), w_ref: (tn, tk) in PyTorch layout -> contract K of both,
    # so the weight is consumed without any transpose.
    acc_ref[...] += lax.dot_general(
        x_ref[...],
        w_ref[...],
        dimension_numbers=(((1,), (1,)), ((), ())),
        preferred_element_type=jnp.float32,
    )

    @pl.when(k == pl.num_programs(2) - 1)
    def _finalize():
        # Bias add + cast in the f32 epilogue; single unmasked lane-dense store.
        o_ref[...] = (acc_ref[...] + b_ref[...]).astype(o_ref.dtype)


def _force_fc_tiled(x, weight, bias):
    M, K = x.shape
    N = weight.shape[0]

    # Tile sizes: sublane-aligned M, 128/256-aligned N and K (MXU friendly on
    # v5e/v6e/v7x), capped so double-buffered tiles stay small in VMEM.
    tm = min(256, _round_up(M, 8))
    tn = min(256, _round_up(N, 128))
    tk = min(512, _round_up(K, 128))

    Mp = _round_up(M, tm)
    Np = _round_up(N, tn)
    Kp = _round_up(K, tk)

    x_p = _pad2d(x, Mp, Kp)
    w_p = _pad2d(weight, Np, Kp)            # stays in PyTorch (N, K) layout
    b_p = _pad2d(jnp.reshape(bias, (1, N)), 1, Np)

    grid = (Mp // tm, Np // tn, Kp // tk)

    # Conservative explicit VMEM budget (double-buffered tiles + accumulator),
    # safe on v7x's smaller (64 MiB) VMEM as well.
    vmem_bytes = 4 * (2 * tm * tk + 2 * tn * tk + 2 * tn + 2 * tm * tn + tm * tn)
    vmem_limit = int(min(max(2 * vmem_bytes, 4 << 20), 32 << 20))

    cost = pl.CostEstimate(
        flops=2 * Mp * Np * Kp,
        transcendentals=0,
        bytes_accessed=4 * (Mp * Kp + Np * Kp + Np + Mp * Np),
    )

    out_p = pl.pallas_call(
        _forcefc_tiled_kernel,
        out_shape=jax.ShapeDtypeStruct((Mp, Np), x.dtype),
        grid_spec=pltpu.PrefetchScalarGridSpec(
            num_scalar_prefetch=0,
            grid=grid,
            in_specs=[
                pl.BlockSpec((tm, tk), lambda i, j, k: (i, k)),
                pl.BlockSpec((tn, tk), lambda i, j, k: (j, k)),
                pl.BlockSpec((1, tn), lambda i, j, k: (0, j)),
            ],
            out_specs=pl.BlockSpec((tm, tn), lambda i, j, k: (i, j)),
            scratch_shapes=[pltpu.VMEM((tm, tn), jnp.float32)],
        ),
        compiler_params=pltpu.CompilerParams(
            dimension_semantics=("parallel", "parallel", "arbitrary"),
            vmem_limit_bytes=vmem_limit,
        ),
        cost_estimate=cost,
    )(x_p, w_p, b_p)

    return out_p[:M, :N]


# --------------------------------------------------------------------------
# Public wrapper: ForceFC.forward(x) == fc1(x) == x @ W.T + b
# --------------------------------------------------------------------------
@jax.jit
def force_fc(x, weight, bias):
    """x: (..., input_dim) f32; weight: (hidden, input_dim) f32 (PyTorch layout);
    bias: (hidden,) f32  ->  (..., hidden) f32."""
    K = x.shape[-1]
    N = weight.shape[0]
    lead = x.shape[:-1]
    x2 = jnp.reshape(x, (-1, K))            # flatten leading dims, like nn.Linear

    if K == 1:
        out2 = _force_fc_k1(x2, weight, bias)
    else:
        out2 = _force_fc_tiled(x2, weight, bias)

    return jnp.reshape(out2, lead + (N,))


if __name__ == "__main__":
    key = jax.random.PRNGKey(0)
    kx, kw, kb, kx2, kw2, kb2 = jax.random.split(key, 6)

    # --- module default shapes: input_dim=1, hidden_size=16 ---------------
    B, input_dim, hidden = 8, 1, 16
    x = jax.random.normal(kx, (B, input_dim), dtype=jnp.float32)
    bound = 1.0 / (input_dim ** 0.5)
    weight = jax.random.uniform(kw, (hidden, input_dim), jnp.float32, -bound, bound)
    bias = jax.random.uniform(kb, (hidden,), jnp.float32, -bound, bound)

    out = force_fc(x, weight, bias)
    jax.block_until_ready(out)
    ref = x @ weight.T + bias
    assert out.shape == (B, hidden)
    assert jnp.allclose(out, ref, atol=1e-5, rtol=1e-5), "small-path mismatch"

    # --- also exercise the tiled MXU path at a realistic Linear size -------
    B2, K2, N2 = 256, 384, 512
    x2 = jax.random.normal(kx2, (B2, K2), dtype=jnp.float32)
    w2 = jax.random.normal(kw2, (N2, K2), dtype=jnp.float32) * 0.05
    b2 = jax.random.normal(kb2, (N2,), dtype=jnp.float32)

    out2 = force_fc(x2, w2, b2)
    jax.block_until_ready(out2)
    ref2 = jnp.dot(x2, w2.T, precision=lax.Precision.HIGHEST) + b2
    assert out2.shape == (B2, N2)
    assert jnp.allclose(out2, ref2, atol=5e-3, rtol=5e-3), "tiled-path mismatch"

    print("KERNEL_OK")
</pallas_src>

<mosaic_0001>
module attributes {stable_mosaic.version = 11 : i64} {
  func.func @_forcefc_k1_kernel(%arg0: i32, %arg1: memref<8x1xf32, #tpu.memory_space<vmem>>, %arg2: memref<1x128xf32, #tpu.memory_space<vmem>>, %arg3: memref<1x128xf32, #tpu.memory_space<vmem>>, %arg4: memref<8x128xf32, #tpu.memory_space<vmem>>) attributes {dimension_semantics = [#tpu.dimension_semantics<parallel>], iteration_bounds = array<i64: 1>, scalar_prefetch = 0 : i64, scratch_operands = 0 : i64, tpu.core_type = #tpu.core_type<tc>, window_params = [{transform_indices = @transform_0, window_bounds = array<i64: 8, 1>}, {pipeline_mode = #tpu.pipeline_mode<synchronous>, transform_indices = @transform_1, window_bounds = array<i64: 1, 128>}, {pipeline_mode = #tpu.pipeline_mode<synchronous>, transform_indices = @transform_2, window_bounds = array<i64: 1, 128>}, {transform_indices = @transform_3, window_bounds = array<i64: 8, 128>}]} {
    %c0 = arith.constant 0 : index
    %c0_0 = arith.constant 0 : index
    %0 = vector.load %arg1[%c0, %c0_0] : memref<8x1xf32, #tpu.memory_space<vmem>>, vector<8x1xf32>
    %c0_1 = arith.constant 0 : index
    %c0_2 = arith.constant 0 : index
    %1 = vector.load %arg2[%c0_1, %c0_2] : memref<1x128xf32, #tpu.memory_space<vmem>>, vector<1x128xf32>
    %2 = vector.broadcast %0 : vector<8x1xf32> to vector<8x128xf32>
    %3 = vector.broadcast %1 : vector<1x128xf32> to vector<8x128xf32>
    %4 = arith.mulf %2, %3 : vector<8x128xf32>
    %c0_3 = arith.constant 0 : index
    %c0_4 = arith.constant 0 : index
    %5 = vector.load %arg3[%c0_3, %c0_4] : memref<1x128xf32, #tpu.memory_space<vmem>>, vector<1x128xf32>
    %6 = vector.broadcast %5 : vector<1x128xf32> to vector<8x128xf32>
    %7 = arith.addf %4, %6 : vector<8x128xf32>
    %c0_5 = arith.constant 0 : index
    %c0_6 = arith.constant 0 : index
    %8 = vector.load %arg4[%c0_5, %c0_6] : memref<8x128xf32, #tpu.memory_space<vmem>>, vector<8x128xf32>
    tpu.vector_store %arg4[%c0_5, %c0_6], %7 {strides = array<i32>} : memref<8x128xf32, #tpu.memory_space<vmem>>, vector<8x128xf32>,
    return
  }
  func.func @transform_0(%arg0: i32) -> (i32, i32) {
    %c0_i32 = arith.constant 0 : i32
    %c0_i32_0 = arith.constant 0 : i32
    return %arg0, %c0_i32 : i32, i32
  }
  func.func @transform_1(%arg0: i32) -> (i32, i32) {
    %c0_i32 = arith.constant 0 : i32
    %c0_i32_0 = arith.constant 0 : i32
    %c0_i32_1 = arith.constant 0 : i32
    return %c0_i32, %c0_i32_0 : i32, i32
  }
  func.func @transform_2(%arg0: i32) -> (i32, i32) {
    %c0_i32 = arith.constant 0 : i32
    %c0_i32_0 = arith.constant 0 : i32
    %c0_i32_1 = arith.constant 0 : i32
    return %c0_i32, %c0_i32_0 : i32, i32
  }
  func.func @transform_3(%arg0: i32) -> (i32, i32) {
    %c0_i32 = arith.constant 0 : i32
    %c0_i32_0 = arith.constant 0 : i32
    return %arg0, %c0_i32 : i32, i32
  }
}

</mosaic_0001>

<llo_original>
// kernel: force_fc.1
$region0: #{force_fc.1}
  #allocation0 [shape = 'u32[]', space=smem, size = 0x4, offset = 0x4, fixed_abs, tag = 'smem constant byte address 0x4 - core index']
  #allocation1 [shape = 'u32[144,128]{1,0:T(1,128)}', space=vmem, size = 0x12000, scoped, tag = 'internal scratch']
  %s0 = inlined_call_operand.vmem [shape: f32[8,1], index: 0, kind: input, shape index: {}]
  %s1 = inlined_call_operand.vmem [shape: f32[1,128], index: 1, kind: input, shape index: {}]
  %s2 = inlined_call_operand.vmem [shape: f32[1,128], index: 2, kind: input, shape index: {}]
  %s3 = inlined_call_operand.hbm [shape: f32[8,128], index: 3, kind: output, shape index: {}]
  %s4 = sld [smem:[#allocation0]]
  $region22: #{force_fc.1} parent=0
    _
  %s6 = ssub.s32 1, %s4
  %s7 = scalar_select 0, %s6, %s4
  $region1: #{force_fc.1} parent=0
    #allocation2 [shape = 'u8[4096]{0}', space=vmem, size = 0x1000, scoped, tag = 'output window, operand 0, single buffered']
    #allocation3 [shape = 's32[1]{0}', space=sflag, size = 0x4, scoped, tag = 'scoped memory for force_fc.1']
    %8 = vsyncpa [#allocation3], 0
    // Predicated region
    $region2: #{force_fc.1} parent=1 // pred_check
      _
    $region3: #{force_fc.1} parent=1 // pred_check_branch
      %10 = sbr.rel (0) target = $region5
    $region4: #{force_fc.1} parent=1 // pred_region
      _
    $region5: #{force_fc.1} parent=1 // pred_fallthru
      _
    // Predicated region
    $region6: #{force_fc.1} parent=1 // pred_check
      _
    $region7: #{force_fc.1} parent=1 // pred_check_branch
      %12 = sbr.rel (0) target = $region9
    $region8: #{force_fc.1} parent=1 // pred_region
      _
    $region9: #{force_fc.1} parent=1 // pred_fallthru
      _
    // Predicated region
    $region10: #{force_fc.1} parent=1 // pred_check
      _
    $region11: #{force_fc.1} parent=1 // pred_check_branch
      %14 = sbr.rel (0) target = $region13
    $region12: #{force_fc.1} parent=1 // pred_region
      _
    $region13: #{force_fc.1} parent=1 // pred_fallthru
      _
    %v15 = vld [vmem:[%s0] sm:$0xff]
    %v16 = vld [vmem:[%s1] sm:$0x1]
    %18 = vset.pattern.permute.xlu0 0
    %19 = vperm.xlu0 %18, %v15
    %v20 = vpop.permute.xlu0 %19
    %v23 = vlaneseq
    %v24 = vshrl.u32 %v23, 7
    %v25 = vsub.s32 0, %v24
    %v26 = vrot.slane %v16, %v25
    %v28 = vmul.f32 %v20, %v26
    %v29 = vld [vmem:[%s2] sm:$0x1]
    %v31 = vlaneseq
    %v32 = vshrl.u32 %v31, 7
    %v33 = vsub.s32 0, %v32
    %v34 = vrot.slane %v29, %v33
    %v36 = vadd.f32 %v28, %v34
    %37 = vst [vmem:[#allocation2] sm:$0xff] %v36
    // Predicated region
    $region14: #{force_fc.1} parent=1 // pred_check
      _
    $region15: #{force_fc.1} parent=1 // pred_check_branch
      %39 = sbr.rel (0) target = $region17
    $region16: #{force_fc.1} parent=1 // pred_region
      %s41 = ssub.s32 128, 128
      %42 = vsyncadd [#allocation3], %s41
      %s44 = sshll.u32 [#allocation2], 4
      %s45 = int_to_ptr.vmem [resolvable:$true] %s44
      %47 = dma.vmem_to_hbm [thread:$0]  %s45, 128, %s3, [#allocation3]
    $region17: #{force_fc.1} parent=1 // pred_fallthru
      _
    // Predicated region
    $region18: #{force_fc.1} parent=1 // pred_check
      _
    $region19: #{force_fc.1} parent=1 // pred_check_branch
      %49 = sbr.rel (0) target = $region21
    $region20: #{force_fc.1} parent=1 // pred_region
      %50 = dma.done [#allocation3], 128
    $region21: #{force_fc.1} parent=1 // pred_fallthru
      _
    %51 = vsyncpa [#allocation3], 1

</llo_original>
